<compile_context>
chip_gen: v7x
topology: tpu7x:2x2x1
jax: 0.10.0
libtpu: 0.0.40
codegen_flags: <defaults>
</compile_context>

<pallas_src>
import math

import jax
import jax.numpy as jnp
from jax.experimental import pallas as pl
from jax.experimental.pallas import tpu as pltpu

IN_DIM = 370          # fixed by the module
LANE = 128


def _round_up(x, m):
    return (x + m - 1) // m * m


IN_PAD = _round_up(IN_DIM, LANE)   # 384


def _autoencoder_kernel(x_ref,
                        w1_ref, b1_ref, w2_ref, b2_ref,
                        w3_ref, b3_ref, w4_ref, b4_ref,
                        enc_ref, dec_ref):
    # x / weights are bf16; biases f32; all matmuls accumulate in f32 on the MXU.
    x = x_ref[...]

    # encoder: Linear(370, mid) -> Tanh -> Linear(mid, out_dim)   (padded shapes)
    h1 = jnp.tanh(
        jnp.dot(x, w1_ref[...], preferred_element_type=jnp.float32) + b1_ref[...]
    )
    enc = (jnp.dot(h1.astype(jnp.bfloat16), w2_ref[...],
                   preferred_element_type=jnp.float32) + b2_ref[...])

    # decoder: Linear(out_dim, mid) -> Tanh -> Linear(mid, 370)   (padded shapes)
    h2 = jnp.tanh(
        jnp.dot(enc.astype(jnp.bfloat16), w3_ref[...],
                preferred_element_type=jnp.float32) + b3_ref[...]
    )
    dec = (jnp.dot(h2.astype(jnp.bfloat16), w4_ref[...],
                   preferred_element_type=jnp.float32) + b4_ref[...])

    enc_ref[...] = enc.astype(enc_ref.dtype)
    dec_ref[...] = dec.astype(dec_ref.dtype)


def make_autoencoder_params(out_dim, key):
    """Deterministic init mimicking nn.Linear default (uniform +-1/sqrt(fan_in)).

    Returns both the exact f32 (unpadded) weights for the reference and the
    lane-padded bf16 weights / f32 biases consumed by the kernel.  Padded
    rows/cols are exactly zero, so the padded compute is mathematically inert.
    """
    mid_dim = math.ceil(math.sqrt(IN_DIM * out_dim))
    mid_pad = _round_up(mid_dim, LANE)
    out_pad = _round_up(out_dim, LANE)
    ks = jax.random.split(key, 8)

    def lin(kw, kb, fan_in, fan_out, in_pad, fan_out_pad):
        bound = 1.0 / math.sqrt(fan_in)
        # stored as (in, out)  (transpose of PyTorch's (out, in) weight)
        w = jax.random.uniform(kw, (fan_in, fan_out), jnp.float32, -bound, bound)
        b = jax.random.uniform(kb, (1, fan_out), jnp.float32, -bound, bound)
        w_p = jnp.zeros((in_pad, fan_out_pad), jnp.float32)
        w_p = w_p.at[:fan_in, :fan_out].set(w).astype(jnp.bfloat16)
        b_p = jnp.zeros((1, fan_out_pad), jnp.float32).at[:, :fan_out].set(b)
        return w, b, w_p, b_p

    w1, b1, w1p, b1p = lin(ks[0], ks[1], IN_DIM, mid_dim, IN_PAD, mid_pad)   # encoder.0
    w2, b2, w2p, b2p = lin(ks[2], ks[3], mid_dim, out_dim, mid_pad, out_pad) # encoder.2
    w3, b3, w3p, b3p = lin(ks[4], ks[5], out_dim, mid_dim, out_pad, mid_pad) # decoder.0
    w4, b4, w4p, b4p = lin(ks[6], ks[7], mid_dim, IN_DIM, mid_pad, IN_PAD)   # decoder.2

    return dict(
        mid_dim=mid_dim, out_dim=out_dim,
        # exact f32 params (reference path)
        w1=w1, b1=b1, w2=w2, b2=b2, w3=w3, b3=b3, w4=w4, b4=b4,
        # lane-padded kernel params
        w1p=w1p, b1p=b1p, w2p=w2p, b2p=b2p, w3p=w3p, b3p=b3p, w4p=w4p, b4p=b4p,
    )


def autoencoder_forward(x, params, *, batch_tile=512):
    """Runs the fused AutoEncoder kernel.  Returns (encoded, decoded) in f32."""
    B, D = x.shape
    assert D == IN_DIM, f"expected {IN_DIM} input features, got {D}"

    out_dim = params["out_dim"]
    mid_pad = params["w1p"].shape[1]
    out_pad = params["w2p"].shape[1]

    # Pick a batch tile: big by default, shrunk (to a multiple of 8) for small
    # batches, and pad B up to a tile multiple instead of asserting.
    tile = _round_up(min(batch_tile, _round_up(B, 8)), 8)
    Bp = _round_up(B, tile)

    # Pad x (batch -> Bp, features 370 -> 384) with zeros and cast to bf16.
    x_p = jnp.pad(x, ((0, Bp - B), (0, IN_PAD - IN_DIM))).astype(jnp.bfloat16)

    def full_spec(shape):
        # full-array block, same block index for every grid step
        return pl.BlockSpec(shape, lambda i: (0,) * len(shape))

    grid = (Bp // tile,)

    enc_p, dec_p = pl.pallas_call(
        _autoencoder_kernel,
        out_shape=(
            jax.ShapeDtypeStruct((Bp, out_pad), jnp.float32),
            jax.ShapeDtypeStruct((Bp, IN_PAD), jnp.float32),
        ),
        grid_spec=pltpu.PrefetchScalarGridSpec(
            num_scalar_prefetch=0,
            grid=grid,
            in_specs=[
                pl.BlockSpec((tile, IN_PAD), lambda i: (i, 0)),  # x
                full_spec((IN_PAD, mid_pad)),   # w1 (bf16)
                full_spec((1, mid_pad)),        # b1 (f32)
                full_spec((mid_pad, out_pad)),  # w2 (bf16)
                full_spec((1, out_pad)),        # b2 (f32)
                full_spec((out_pad, mid_pad)),  # w3 (bf16)
                full_spec((1, mid_pad)),        # b3 (f32)
                full_spec((mid_pad, IN_PAD)),   # w4 (bf16)
                full_spec((1, IN_PAD)),         # b4 (f32)
            ],
            out_specs=[
                pl.BlockSpec((tile, out_pad), lambda i: (i, 0)),  # encoded (padded)
                pl.BlockSpec((tile, IN_PAD), lambda i: (i, 0)),   # decoded (padded)
            ],
        ),
        compiler_params=pltpu.CompilerParams(
            dimension_semantics=("parallel",),
        ),
    )(x_p,
      params["w1p"], params["b1p"], params["w2p"], params["b2p"],
      params["w3p"], params["b3p"], params["w4p"], params["b4p"])

    # Strip the batch / lane padding.
    return enc_p[:B, :out_dim], dec_p[:B, :IN_DIM]


def _reference_forward(x, p):
    """Exact f32 reference (matches the PyTorch module)."""
    h1 = jnp.tanh(x @ p["w1"] + p["b1"])
    enc = h1 @ p["w2"] + p["b2"]
    h2 = jnp.tanh(enc @ p["w3"] + p["b3"])
    dec = h2 @ p["w4"] + p["b4"]
    return enc, dec


if __name__ == "__main__":
    key = jax.random.PRNGKey(0)
    k_x, k_p = jax.random.split(key)

    out_dim = 16            # mid_dim = ceil(sqrt(370*16)) = 77 -> padded to 128
    batch = 16              # small test batch; wrapper pads/tiles as needed
    x = jax.random.normal(k_x, (batch, IN_DIM), jnp.float32)

    params = make_autoencoder_params(out_dim, k_p)

    enc, dec = autoencoder_forward(x, params)
    enc, dec = jax.block_until_ready((enc, dec))

    # sanity check against plain-JAX f32 reference (kernel matmuls are bf16)
    enc_ref, dec_ref = _reference_forward(x, params)
    assert enc.shape == (batch, out_dim) and dec.shape == (batch, IN_DIM)
    assert jnp.allclose(enc, enc_ref, atol=5e-2, rtol=5e-2), (
        float(jnp.max(jnp.abs(enc - enc_ref))))
    assert jnp.allclose(dec, dec_ref, atol=5e-2, rtol=5e-2), (
        float(jnp.max(jnp.abs(dec - dec_ref))))

    print("KERNEL_OK")
</pallas_src>

<mosaic_0001>
module attributes {stable_mosaic.version = 11 : i64} {
  func.func @_autoencoder_kernel(%arg0: i32, %arg1: memref<16x384xbf16, #tpu.memory_space<vmem>>, %arg2: memref<384x128xbf16, #tpu.memory_space<vmem>>, %arg3: memref<1x128xf32, #tpu.memory_space<vmem>>, %arg4: memref<128x128xbf16, #tpu.memory_space<vmem>>, %arg5: memref<1x128xf32, #tpu.memory_space<vmem>>, %arg6: memref<128x128xbf16, #tpu.memory_space<vmem>>, %arg7: memref<1x128xf32, #tpu.memory_space<vmem>>, %arg8: memref<128x384xbf16, #tpu.memory_space<vmem>>, %arg9: memref<1x384xf32, #tpu.memory_space<vmem>>, %arg10: memref<16x128xf32, #tpu.memory_space<vmem>>, %arg11: memref<16x384xf32, #tpu.memory_space<vmem>>) attributes {dimension_semantics = [#tpu.dimension_semantics<parallel>], iteration_bounds = array<i64: 1>, scalar_prefetch = 0 : i64, scratch_operands = 0 : i64, tpu.core_type = #tpu.core_type<tc>, window_params = [{transform_indices = @transform_0, window_bounds = array<i64: 16, 384>}, {pipeline_mode = #tpu.pipeline_mode<synchronous>, transform_indices = @transform_1, window_bounds = array<i64: 384, 128>}, {pipeline_mode = #tpu.pipeline_mode<synchronous>, transform_indices = @transform_2, window_bounds = array<i64: 1, 128>}, {pipeline_mode = #tpu.pipeline_mode<synchronous>, transform_indices = @transform_3, window_bounds = array<i64: 128, 128>}, {pipeline_mode = #tpu.pipeline_mode<synchronous>, transform_indices = @transform_4, window_bounds = array<i64: 1, 128>}, {pipeline_mode = #tpu.pipeline_mode<synchronous>, transform_indices = @transform_5, window_bounds = array<i64: 128, 128>}, {pipeline_mode = #tpu.pipeline_mode<synchronous>, transform_indices = @transform_6, window_bounds = array<i64: 1, 128>}, {pipeline_mode = #tpu.pipeline_mode<synchronous>, transform_indices = @transform_7, window_bounds = array<i64: 128, 384>}, {pipeline_mode = #tpu.pipeline_mode<synchronous>, transform_indices = @transform_8, window_bounds = array<i64: 1, 384>}, {transform_indices = @transform_9, window_bounds = array<i64: 16, 128>}, {transform_indices = @transform_10, window_bounds = array<i64: 16, 384>}]} {
    %c0 = arith.constant 0 : index
    %c0_0 = arith.constant 0 : index
    %0 = vector.load %arg1[%c0, %c0_0] : memref<16x384xbf16, #tpu.memory_space<vmem>>, vector<16x384xbf16>
    %c0_1 = arith.constant 0 : index
    %c0_2 = arith.constant 0 : index
    %1 = vector.load %arg2[%c0_1, %c0_2] : memref<384x128xbf16, #tpu.memory_space<vmem>>, vector<384x128xbf16>
    %cst = arith.constant dense<0.000000e+00> : vector<16x128xf32>
    %2 = tpu.matmul %0, %1, %cst {dimension_numbers = #tpu.dot_dimension_numbers<[1], [0], [0], [1], [0, 0, 1, 1], [], []>} : vector<16x384xbf16>, vector<384x128xbf16>, vector<16x128xf32> -> vector<16x128xf32>
    %c0_3 = arith.constant 0 : index
    %c0_4 = arith.constant 0 : index
    %3 = vector.load %arg3[%c0_3, %c0_4] : memref<1x128xf32, #tpu.memory_space<vmem>>, vector<1x128xf32>
    %4 = vector.broadcast %3 : vector<1x128xf32> to vector<16x128xf32>
    %5 = arith.addf %2, %4 : vector<16x128xf32>
    %6 = math.tanh %5 : vector<16x128xf32>
    %7 = arith.truncf %6 : vector<16x128xf32> to vector<16x128xbf16>
    %c0_5 = arith.constant 0 : index
    %c0_6 = arith.constant 0 : index
    %8 = vector.load %arg4[%c0_5, %c0_6] : memref<128x128xbf16, #tpu.memory_space<vmem>>, vector<128x128xbf16>
    %cst_7 = arith.constant dense<0.000000e+00> : vector<16x128xf32>
    %9 = tpu.matmul %7, %8, %cst_7 {dimension_numbers = #tpu.dot_dimension_numbers<[1], [0], [0], [1], [0, 0, 1, 1], [], []>} : vector<16x128xbf16>, vector<128x128xbf16>, vector<16x128xf32> -> vector<16x128xf32>
    %c0_8 = arith.constant 0 : index
    %c0_9 = arith.constant 0 : index
    %10 = vector.load %arg5[%c0_8, %c0_9] : memref<1x128xf32, #tpu.memory_space<vmem>>, vector<1x128xf32>
    %11 = vector.broadcast %10 : vector<1x128xf32> to vector<16x128xf32>
    %12 = arith.addf %9, %11 : vector<16x128xf32>
    %13 = arith.truncf %12 : vector<16x128xf32> to vector<16x128xbf16>
    %c0_10 = arith.constant 0 : index
    %c0_11 = arith.constant 0 : index
    %14 = vector.load %arg6[%c0_10, %c0_11] : memref<128x128xbf16, #tpu.memory_space<vmem>>, vector<128x128xbf16>
    %cst_12 = arith.constant dense<0.000000e+00> : vector<16x128xf32>
    %15 = tpu.matmul %13, %14, %cst_12 {dimension_numbers = #tpu.dot_dimension_numbers<[1], [0], [0], [1], [0, 0, 1, 1], [], []>} : vector<16x128xbf16>, vector<128x128xbf16>, vector<16x128xf32> -> vector<16x128xf32>
    %c0_13 = arith.constant 0 : index
    %c0_14 = arith.constant 0 : index
    %16 = vector.load %arg7[%c0_13, %c0_14] : memref<1x128xf32, #tpu.memory_space<vmem>>, vector<1x128xf32>
    %17 = vector.broadcast %16 : vector<1x128xf32> to vector<16x128xf32>
    %18 = arith.addf %15, %17 : vector<16x128xf32>
    %19 = math.tanh %18 : vector<16x128xf32>
    %20 = arith.truncf %19 : vector<16x128xf32> to vector<16x128xbf16>
    %c0_15 = arith.constant 0 : index
    %c0_16 = arith.constant 0 : index
    %21 = vector.load %arg8[%c0_15, %c0_16] : memref<128x384xbf16, #tpu.memory_space<vmem>>, vector<128x384xbf16>
    %cst_17 = arith.constant dense<0.000000e+00> : vector<16x384xf32>
    %22 = tpu.matmul %20, %21, %cst_17 {dimension_numbers = #tpu.dot_dimension_numbers<[1], [0], [0], [1], [0, 0, 1, 1], [], []>} : vector<16x128xbf16>, vector<128x384xbf16>, vector<16x384xf32> -> vector<16x384xf32>
    %c0_18 = arith.constant 0 : index
    %c0_19 = arith.constant 0 : index
    %23 = vector.load %arg9[%c0_18, %c0_19] : memref<1x384xf32, #tpu.memory_space<vmem>>, vector<1x384xf32>
    %24 = vector.broadcast %23 : vector<1x384xf32> to vector<16x384xf32>
    %25 = arith.addf %22, %24 : vector<16x384xf32>
    %c0_20 = arith.constant 0 : index
    %c0_21 = arith.constant 0 : index
    %26 = vector.load %arg10[%c0_20, %c0_21] : memref<16x128xf32, #tpu.memory_space<vmem>>, vector<16x128xf32>
    tpu.vector_store %arg10[%c0_20, %c0_21], %12 {strides = array<i32>} : memref<16x128xf32, #tpu.memory_space<vmem>>, vector<16x128xf32>,
    %c0_22 = arith.constant 0 : index
    %c0_23 = arith.constant 0 : index
    %27 = vector.load %arg11[%c0_22, %c0_23] : memref<16x384xf32, #tpu.memory_space<vmem>>, vector<16x384xf32>
    tpu.vector_store %arg11[%c0_22, %c0_23], %25 {strides = array<i32>} : memref<16x384xf32, #tpu.memory_space<vmem>>, vector<16x384xf32>,
    return
  }
  func.func @transform_0(%arg0: i32) -> (i32, i32) {
    %c0_i32 = arith.constant 0 : i32
    %c0_i32_0 = arith.constant 0 : i32
    return %arg0, %c0_i32 : i32, i32
  }
  func.func @transform_1(%arg0: i32) -> (i32, i32) {
    %c0_i32 = arith.constant 0 : i32
    %c0_i32_0 = arith.constant 0 : i32
    %c0_i32_1 = arith.constant 0 : i32
    return %c0_i32, %c0_i32_0 : i32, i32
  }
  func.func @transform_2(%arg0: i32) -> (i32, i32) {
    %c0_i32 = arith.constant 0 : i32
    %c0_i32_0 = arith.constant 0 : i32
    %c0_i32_1 = arith.constant 0 : i32
    return %c0_i32, %c0_i32_0 : i32, i32
  }
  func.func @transform_3(%arg0: i32) -> (i32, i32) {
    %c0_i32 = arith.constant 0 : i32
    %c0_i32_0 = arith.constant 0 : i32
    %c0_i32_1 = arith.constant 0 : i32
    return %c0_i32, %c0_i32_0 : i32, i32
  }
  func.func @transform_4(%arg0: i32) -> (i32, i32) {
    %c0_i32 = arith.constant 0 : i32
    %c0_i32_0 = arith.constant 0 : i32
    %c0_i32_1 = arith.constant 0 : i32
    return %c0_i32, %c0_i32_0 : i32, i32
  }
  func.func @transform_5(%arg0: i32) -> (i32, i32) {
    %c0_i32 = arith.constant 0 : i32
    %c0_i32_0 = arith.constant 0 : i32
    %c0_i32_1 = arith.constant 0 : i32
    return %c0_i32, %c0_i32_0 : i32, i32
  }
  func.func @transform_6(%arg0: i32) -> (i32, i32) {
    %c0_i32 = arith.constant 0 : i32
    %c0_i32_0 = arith.constant 0 : i32
    %c0_i32_1 = arith.constant 0 : i32
    return %c0_i32, %c0_i32_0 : i32, i32
  }
  func.func @transform_7(%arg0: i32) -> (i32, i32) {
    %c0_i32 = arith.constant 0 : i32
    %c0_i32_0 = arith.constant 0 : i32
    %c0_i32_1 = arith.constant 0 : i32
    return %c0_i32, %c0_i32_0 : i32, i32
  }
  func.func @transform_8(%arg0: i32) -> (i32, i32) {
    %c0_i32 = arith.constant 0 : i32
    %c0_i32_0 = arith.constant 0 : i32
    %c0_i32_1 = arith.constant 0 : i32
    return %c0_i32, %c0_i32_0 : i32, i32
  }
  func.func @transform_9(%arg0: i32) -> (i32, i32) {
    %c0_i32 = arith.constant 0 : i32
    %c0_i32_0 = arith.constant 0 : i32
    return %arg0, %c0_i32 : i32, i32
  }
  func.func @transform_10(%arg0: i32) -> (i32, i32) {
    %c0_i32 = arith.constant 0 : i32
    %c0_i32_0 = arith.constant 0 : i32
    return %arg0, %c0_i32 : i32, i32
  }
}

</mosaic_0001>

<llo_original>
// kernel: tpu_custom_call.1
$region0: #{tpu_custom_call.1}
  #allocation0 [shape = 'u32[]', space=smem, size = 0x4, offset = 0x4, fixed_abs, tag = 'smem constant byte address 0x4 - core index']
  #allocation1 [shape = 'u32[144,128]{1,0:T(1,128)}', space=vmem, size = 0x12000, scoped, tag = 'internal scratch']
  %s0 = inlined_call_operand.hbm [shape: bf16[16,384], index: 0, kind: input, shape index: {}]
  %s1 = inlined_call_operand.hbm [shape: bf16[384,128], index: 1, kind: input, shape index: {}]
  %s2 = inlined_call_operand.vmem [shape: f32[1,128], index: 2, kind: input, shape index: {}]
  %s3 = inlined_call_operand.hbm [shape: bf16[128,128], index: 3, kind: input, shape index: {}]
  %s4 = inlined_call_operand.vmem [shape: f32[1,128], index: 4, kind: input, shape index: {}]
  %s5 = inlined_call_operand.hbm [shape: bf16[128,128], index: 5, kind: input, shape index: {}]
  %s6 = inlined_call_operand.vmem [shape: f32[1,128], index: 6, kind: input, shape index: {}]
  %s7 = inlined_call_operand.hbm [shape: bf16[128,384], index: 7, kind: input, shape index: {}]
  %s8 = inlined_call_operand.vmem [shape: f32[1,384], index: 8, kind: input, shape index: {}]
  %s9 = inlined_call_operand.hbm [shape: f32[16,128], index: 9, kind: output, shape index: {0}]
  %s10 = inlined_call_operand.hbm [shape: f32[16,384], index: 10, kind: output, shape index: {1}]
  %11 = xla_tuple %s9, %s10
  %s12 = sld [smem:[#allocation0]]
  $region74: #{tpu_custom_call.1} parent=0
    _
  %s14 = ssub.s32 1, %s12
  %s15 = scalar_select 0, %s14, %s12
  $region1: #{tpu_custom_call.1} parent=0
    #allocation2 [shape = 'u8[12288]{0}', space=vmem, size = 0x3000, scoped, tag = 'input window, operand 0, single buffered']
    #allocation3 [shape = 's32[1]{0}', space=sflag, size = 0x4, scoped, tag = 'scoped memory for tpu_custom_call.1']
    #allocation4 [shape = 's32[1]{0}', space=sflag, size = 0x4, scoped, tag = 'scoped memory for tpu_custom_call.1']
    #allocation5 [shape = 'u8[98304]{0}', space=vmem, size = 0x18000, scoped, tag = 'input window, operand 1, single buffered']
    #allocation6 [shape = 's32[1]{0}', space=sflag, size = 0x4, scoped, tag = 'scoped memory for tpu_custom_call.1']
    #allocation7 [shape = 'u8[32768]{0}', space=vmem, size = 0x8000, scoped, tag = 'input window, operand 3, single buffered']
    #allocation8 [shape = 'u8[32768]{0}', space=vmem, size = 0x8000, scoped, tag = 'input window, operand 5, single buffered']
    #allocation9 [shape = 's32[1]{0}', space=sflag, size = 0x4, scoped, tag = 'scoped memory for tpu_custom_call.1']
    #allocation10 [shape = 'u8[98304]{0}', space=vmem, size = 0x18000, scoped, tag = 'input window, operand 7, single buffered']
    #allocation11 [shape = 'u8[8192]{0}', space=vmem, size = 0x2000, scoped, tag = 'output window, operand 0, single buffered']
    #allocation12 [shape = 'u8[24576]{0}', space=vmem, size = 0x6000, scoped, tag = 'output window, operand 1, single buffered']
    #allocation13 [shape = 's32[1]{0}', space=sflag, size = 0x4, scoped, tag = 'scoped memory for tpu_custom_call.1']
    %16 = vsyncpa [#allocation3], 0
    %17 = vsyncpa [#allocation6], 0
    %18 = vsyncpa [#allocation9], 0
    %19 = vsyncpa [#allocation4], 0
    %20 = vsyncpa [#allocation13], 0
    // Predicated region
    $region2: #{tpu_custom_call.1} parent=1 // pred_check
      _
    $region3: #{tpu_custom_call.1} parent=1 // pred_check_branch
      %22 = sbr.rel (0) target = $region5
    $region4: #{tpu_custom_call.1} parent=1 // pred_region
      %s24 = ssub.s32 384, 384
      %25 = vsyncadd [#allocation3], %s24
      %s26 = sshll.u32 [#allocation2], 4
      %s27 = int_to_ptr.vmem [resolvable:$true] %s26
      %32 = dma.hbm_to_vmem [thread:$0]  %s0, 384, %s27, [#allocation3], 192, 192, 12
    $region5: #{tpu_custom_call.1} parent=1 // pred_fallthru
      _
    // Predicated region
    $region6: #{tpu_custom_call.1} parent=1 // pred_check
      _
    $region7: #{tpu_custom_call.1} parent=1 // pred_check_branch
      %34 = sbr.rel (0) target = $region9
    $region8: #{tpu_custom_call.1} parent=1 // pred_region
      %s36 = ssub.s32 3072, 3072
      %37 = vsyncadd [#allocation6], %s36
      %s38 = sshll.u32 [#allocation5], 4
      %s39 = int_to_ptr.vmem [resolvable:$true] %s38
      %44 = dma.hbm_to_vmem [thread:$0]  %s1, 3072, %s39, [#allocation6], 64, 64, 4
    $region9: #{tpu_custom_call.1} parent=1 // pred_fallthru
      _
    // Predicated region
    $region10: #{tpu_custom_call.1} parent=1 // pred_check
      _
    $region11: #{tpu_custom_call.1} parent=1 // pred_check_branch
      %46 = sbr.rel (0) target = $region13
    $region12: #{tpu_custom_call.1} parent=1 // pred_region
      _
    $region13: #{tpu_custom_call.1} parent=1 // pred_fallthru
      _
    // Predicated region
    $region14: #{tpu_custom_call.1} parent=1 // pred_check
      _
    $region15: #{tpu_custom_call.1} parent=1 // pred_check_branch
      %48 = sbr.rel (0) target = $region17
    $region16: #{tpu_custom_call.1} parent=1 // pred_region
      %s50 = ssub.s32 1024, 1024
      %51 = vsyncadd [#allocation6], %s50
      %s52 = sshll.u32 [#allocation7], 4
      %s53 = int_to_ptr.vmem [resolvable:$true] %s52
      %58 = dma.hbm_to_vmem [thread:$0]  %s3, 1024, %s53, [#allocation6], 64, 64, 4
    $region17: #{tpu_custom_call.1} parent=1 // pred_fallthru
      _
    // Predicated region
    $region18: #{tpu_custom_call.1} parent=1 // pred_check
      _
    $region19: #{tpu_custom_call.1} parent=1 // pred_check_branch
      %60 = sbr.rel (0) target = $region21
    $region20: #{tpu_custom_call.1} parent=1 // pred_region
      _
    $region21: #{tpu_custom_call.1} parent=1 // pred_fallthru
      _
    // Predicated region
    $region22: #{tpu_custom_call.1} parent=1 // pred_check
      _
    $region23: #{tpu_custom_call.1} parent=1 // pred_check_branch
      %62 = sbr.rel (0) target = $region25
    $region24: #{tpu_custom_call.1} parent=1 // pred_region
      %s64 = ssub.s32 1024, 1024
      %65 = vsyncadd [#allocation9], %s64
      %s66 = sshll.u32 [#allocation8], 4
      %s67 = int_to_ptr.vmem [resolvable:$true] %s66
      %72 = dma.hbm_to_vmem [thread:$0]  %s5, 1024, %s67, [#allocation9], 64, 64, 4
    $region25: #{tpu_custom_call.1} parent=1 // pred_fallthru
      _
    // Predicated region
    $region26: #{tpu_custom_call.1} parent=1 // pred_check
      _
    $region27: #{tpu_custom_call.1} parent=1 // pred_check_branch
      %74 = sbr.rel (0) target = $region29
    $region28: #{tpu_custom_call.1} parent=1 // pred_region
      _
    $region29: #{tpu_custom_call.1} parent=1 // pred_fallthru
      _
    // Predicated region
    $region30: #{tpu_custom_call.1} parent=1 // pred_check
      _
    $region31: #{tpu_custom_call.1} parent=1 // pred_check_branch
      %76 = sbr.rel (0) target = $region33
    $region32: #{tpu_custom_call.1} parent=1 // pred_region
      %s78 = ssub.s32 3072, 3072
      %79 = vsyncadd [#allocation9], %s78
      %s80 = sshll.u32 [#allocation10], 4
      %s81 = int_to_ptr.vmem [resolvable:$true] %s80
      %86 = dma.hbm_to_vmem [thread:$0]  %s7, 3072, %s81, [#allocation9], 192, 192, 12
    $region33: #{tpu_custom_call.1} parent=1 // pred_fallthru
      _
    // Predicated region
    $region34: #{tpu_custom_call.1} parent=1 // pred_check
      _
    $region35: #{tpu_custom_call.1} parent=1 // pred_check_branch
      %88 = sbr.rel (0) target = $region37
    $region36: #{tpu_custom_call.1} parent=1 // pred_region
      _
    $region37: #{tpu_custom_call.1} parent=1 // pred_fallthru
      _
    // Predicated region
    $region38: #{tpu_custom_call.1} parent=1 // pred_check
      _
    $region39: #{tpu_custom_call.1} parent=1 // pred_check_branch
      %90 = sbr.rel (0) target = $region41
    $region40: #{tpu_custom_call.1} parent=1 // pred_region
      %91 = dma.done [#allocation3], 384
    $region41: #{tpu_custom_call.1} parent=1 // pred_fallthru
      _
    // Predicated region
    $region42: #{tpu_custom_call.1} parent=1 // pred_check
      _
    $region43: #{tpu_custom_call.1} parent=1 // pred_check_branch
      %93 = sbr.rel (0) target = $region45
    $region44: #{tpu_custom_call.1} parent=1 // pred_region
      %94 = dma.done [#allocation6], 3072
    $region45: #{tpu_custom_call.1} parent=1 // pred_fallthru
      _
    // Predicated region
    $region46: #{tpu_custom_call.1} parent=1 // pred_check
      _
    $region47: #{tpu_custom_call.1} parent=1 // pred_check_branch
      %96 = sbr.rel (0) target = $region49
    $region48: #{tpu_custom_call.1} parent=1 // pred_region
      %97 = dma.done [#allocation6], 1024
    $region49: #{tpu_custom_call.1} parent=1 // pred_fallthru
      _
    // Predicated region
    $region50: #{tpu_custom_call.1} parent=1 // pred_check
      _
    $region51: #{tpu_custom_call.1} parent=1 // pred_check_branch
      %99 = sbr.rel (0) target = $region53
    $region52: #{tpu_custom_call.1} parent=1 // pred_region
      %100 = dma.done [#allocation9], 1024
    $region53: #{tpu_custom_call.1} parent=1 // pred_fallthru
      _
    // Predicated region
    $region54: #{tpu_custom_call.1} parent=1 // pred_check
      _
    $region55: #{tpu_custom_call.1} parent=1 // pred_check_branch
      %102 = sbr.rel (0) target = $region57
    $region56: #{tpu_custom_call.1} parent=1 // pred_region
      %103 = dma.done [#allocation9], 3072
    $region57: #{tpu_custom_call.1} parent=1 // pred_fallthru
      _
    %v105 = vld [vmem:[#allocation2] sm:$0xff]
    %v106 = vld [vmem:[#allocation2 + $0x8] sm:$0xf]
    %v107 = vld [vmem:[#allocation2 + $0xc] sm:$0xff]
    %v108 = vld [vmem:[#allocation2 + $0x14] sm:$0xf]
    %v109 = vld [vmem:[#allocation5] sm:$0xf]
    %v110 = vld [vmem:[#allocation5 + $0x4] sm:$0xf]
    %v111 = vld [vmem:[#allocation5 + $0x8] sm:$0xf]
    %v112 = vld [vmem:[#allocation5 + $0xc] sm:$0xf]
    %v113 = vld [vmem:[#allocation5 + $0x10] sm:$0xf]
    %v114 = vld [vmem:[#allocation5 + $0x14] sm:$0xf]
    %v115 = vld [vmem:[#allocation5 + $0x18] sm:$0xf]
    %v116 = vld [vmem:[#allocation5 + $0x1c] sm:$0xf]
    %v117 = vld [vmem:[#allocation5 + $0x20] sm:$0xf]
    %v118 = vld [vmem:[#allocation5 + $0x24] sm:$0xf]
    %v119 = vld [vmem:[#allocation5 + $0x28] sm:$0xf]
    %v120 = vld [vmem:[#allocation5 + $0x2c] sm:$0xf]
    %v121 = vld [vmem:[#allocation5 + $0x30] sm:$0xf]
    %v122 = vld [vmem:[#allocation5 + $0x34] sm:$0xf]
    %v123 = vld [vmem:[#allocation5 + $0x38] sm:$0xf]
    %v124 = vld [vmem:[#allocation5 + $0x3c] sm:$0xf]
    %v125 = vld [vmem:[#allocation5 + $0x40] sm:$0xf]
    %v126 = vld [vmem:[#allocation5 + $0x44] sm:$0xf]
    %v127 = vld [vmem:[#allocation5 + $0x48] sm:$0xf]
    %v128 = vld [vmem:[#allocation5 + $0x4c] sm:$0xf]
    %v129 = vld [vmem:[#allocation5 + $0x50] sm:$0xf]
    %v130 = vld [vmem:[#allocation5 + $0x54] sm:$0xf]
    %v131 = vld [vmem:[#allocation5 + $0x58] sm:$0xf]
    %v132 = vld [vmem:[#allocation5 + $0x5c] sm:$0xf]
    %v133 = vld [vmem:[#allocation5 + $0x60] sm:$0xf]
    %v134 = vld [vmem:[#allocation5 + $0x64] sm:$0xf]
    %v135 = vld [vmem:[#allocation5 + $0x68] sm:$0xf]
    %v136 = vld [vmem:[#allocation5 + $0x6c] sm:$0xf]
    %v137 = vld [vmem:[#allocation5 + $0x70] sm:$0xf]
    %v138 = vld [vmem:[#allocation5 + $0x74] sm:$0xf]
    %v139 = vld [vmem:[#allocation5 + $0x78] sm:$0xf]
    %v140 = vld [vmem:[#allocation5 + $0x7c] sm:$0xf]
    %v141 = vld [vmem:[#allocation5 + $0x80] sm:$0xf]
    %v142 = vld [vmem:[#allocation5 + $0x84] sm:$0xf]
    %v143 = vld [vmem:[#allocation5 + $0x88] sm:$0xf]
    %v144 = vld [vmem:[#allocation5 + $0x8c] sm:$0xf]
    %v145 = vld [vmem:[#allocation5 + $0x90] sm:$0xf]
    %v146 = vld [vmem:[#allocation5 + $0x94] sm:$0xf]
    %v147 = vld [vmem:[#allocation5 + $0x98] sm:$0xf]
    %v148 = vld [vmem:[#allocation5 + $0x9c] sm:$0xf]
    %v149 = vld [vmem:[#allocation5 + $0xa0] sm:$0xf]
    %v150 = vld [vmem:[#allocation5 + $0xa4] sm:$0xf]
    %v151 = vld [vmem:[#allocation5 + $0xa8] sm:$0xf]
    %v152 = vld [vmem:[#allocation5 + $0xac] sm:$0xf]
    %v153 = vld [vmem:[#allocation5 + $0xb0] sm:$0xf]
    %v154 = vld [vmem:[#allocation5 + $0xb4] sm:$0xf]
    %v155 = vld [vmem:[#allocation5 + $0xb8] sm:$0xf]
    %v156 = vld [vmem:[#allocation5 + $0xbc] sm:$0xf]
    %v157 = vld [vmem:[%s2] sm:$0x1]
    %v159 = vlaneseq
    %v160 = vshrl.u32 %v159, 7
    %v161 = vsub.s32 0, %v160
    %v162 = vrot.slane %v157, %v161
    %v168 = vunpack.c.l.b16 %v105
    %v169 = vunpack.c.h.b16 %v105
    %v170 = vunpack.c.l.b16 %v106
    %v171 = vunpack.c.l.b16 %v107
    %v172 = vunpack.c.h.b16 %v107
    %v173 = vunpack.c.l.b16 %v108
    %v174 = vpack.c.b16 %v171, %v168
    %v175 = vpack.c.b16 %v172, %v169
    %v176 = vpack.c.b16 %v173, %v170
    %v228 = vunpack.c.l.b16 %v109
    %v229 = vunpack.c.l.b16 %v110
    %v230 = vunpack.c.l.b16 %v111
    %v231 = vunpack.c.l.b16 %v112
    %v232 = vunpack.c.l.b16 %v113
    %v233 = vunpack.c.l.b16 %v114
    %v234 = vunpack.c.l.b16 %v115
    %v235 = vunpack.c.l.b16 %v116
    %v236 = vunpack.c.l.b16 %v117
    %v237 = vunpack.c.l.b16 %v118
    %v238 = vunpack.c.l.b16 %v119
    %v239 = vunpack.c.l.b16 %v120
    %v240 = vunpack.c.l.b16 %v121
    %v241 = vunpack.c.l.b16 %v122
    %v242 = vunpack.c.l.b16 %v123
    %v243 = vunpack.c.l.b16 %v124
    %v244 = vunpack.c.l.b16 %v125
    %v245 = vunpack.c.l.b16 %v126
    %v246 = vunpack.c.l.b16 %v127
    %v247 = vunpack.c.l.b16 %v128
    %v248 = vunpack.c.l.b16 %v129
    %v249 = vunpack.c.l.b16 %v130
    %v250 = vunpack.c.l.b16 %v131
    %v251 = vunpack.c.l.b16 %v132
    %v252 = vunpack.c.l.b16 %v133
    %v253 = vunpack.c.l.b16 %v134
    %v254 = vunpack.c.l.b16 %v135
    %v255 = vunpack.c.l.b16 %v136
    %v256 = vunpack.c.l.b16 %v137
    %v257 = vunpack.c.l.b16 %v138
    %v258 = vunpack.c.l.b16 %v139
    %v259 = vunpack.c.l.b16 %v140
    %v260 = vunpack.c.l.b16 %v141
    %v261 = vunpack.c.l.b16 %v142
    %v262 = vunpack.c.l.b16 %v143
    %v263 = vunpack.c.l.b16 %v144
    %v264 = vunpack.c.l.b16 %v145
    %v265 = vunpack.c.l.b16 %v146
    %v266 = vunpack.c.l.b16 %v147
    %v267 = vunpack.c.l.b16 %v148
    %v268 = vunpack.c.l.b16 %v149
    %v269 = vunpack.c.l.b16 %v150
    %v270 = vunpack.c.l.b16 %v151
    %v271 = vunpack.c.l.b16 %v152
    %v272 = vunpack.c.l.b16 %v153
    %v273 = vunpack.c.l.b16 %v154
    %v274 = vunpack.c.l.b16 %v155
    %v275 = vunpack.c.l.b16 %v156
    %v276 = vpack.c.b16 %v229, %v228
    %v277 = vpack.c.b16 %v231, %v230
    %v278 = vpack.c.b16 %v233, %v232
    %v279 = vpack.c.b16 %v235, %v234
    %v280 = vpack.c.b16 %v237, %v236
    %v281 = vpack.c.b16 %v239, %v238
    %v282 = vpack.c.b16 %v241, %v240
    %v283 = vpack.c.b16 %v243, %v242
    %v284 = vpack.c.b16 %v245, %v244
    %v285 = vpack.c.b16 %v247, %v246
    %v286 = vpack.c.b16 %v249, %v248
    %v287 = vpack.c.b16 %v251, %v250
    %v288 = vpack.c.b16 %v253, %v252
    %v289 = vpack.c.b16 %v255, %v254
    %v290 = vpack.c.b16 %v257, %v256
    %v291 = vpack.c.b16 %v259, %v258
    %v292 = vpack.c.b16 %v261, %v260
    %v293 = vpack.c.b16 %v263, %v262
    %v294 = vpack.c.b16 %v265, %v264
    %v295 = vpack.c.b16 %v267, %v266
    %v296 = vpack.c.b16 %v269, %v268
    %v297 = vpack.c.b16 %v271, %v270
    %v298 = vpack.c.b16 %v273, %v272
    %v299 = vpack.c.b16 %v275, %v274
    %324 = vmatprep.subr.bf16.mxu0 0
    %325 = vmatpush1.bf16.msra.mxu0 %v276
    %326 = vmatprep.subr.bf16.mxu0 0
    %327 = vmatpush1.bf16.msra.mxu0 %v277
    %328 = vmatprep.subr.bf16.mxu0 0
    %329 = vmatpush1.bf16.msra.mxu0 %v278
    %330 = vmatprep.subr.bf16.mxu0 0
    %331 = vmatpush1.bf16.msra.mxu0 %v279
    %332 = vmatprep.subr.bf16.mxu0 0
    %333 = vmatpush1.bf16.msra.mxu0 %v280
    %334 = vmatprep.subr.bf16.mxu0 0
    %335 = vmatpush1.bf16.msra.mxu0 %v281
    %336 = vmatprep.subr.bf16.mxu0 0
    %337 = vmatpush1.bf16.msra.mxu0 %v282
    %338 = vmatprep.subr.bf16.mxu0 0
    %339 = vmatpush1.bf16.msra.mxu0 %v283
    %340 = vmatprep.subr.bf16.mxu0 0
    %341 = vmatpush1.bf16.msra.mxu0 %v284
    %342 = vmatprep.subr.bf16.mxu0 0
    %343 = vmatpush1.bf16.msra.mxu0 %v285
    %344 = vmatprep.subr.bf16.mxu0 0
    %345 = vmatpush1.bf16.msra.mxu0 %v286
    %346 = vmatprep.subr.bf16.mxu0 0
    %347 = vmatpush1.bf16.msra.mxu0 %v287
    %348 = vmatprep.subr.bf16.mxu0 0
    %349 = vmatpush1.bf16.msra.mxu0 %v288
    %350 = vmatprep.subr.bf16.mxu0 0
    %351 = vmatpush1.bf16.msra.mxu0 %v289
    %352 = vmatprep.subr.bf16.mxu0 0
    %353 = vmatpush1.bf16.msra.mxu0 %v290
    %354 = vmatprep.subr.bf16.mxu0 0
    %355 = vmatpush1.bf16.msra.mxu0 %v291
    %356 = vmatprep.mubr.bf16.mxu0 %v175
    %357 = vmatmul.mubr.bf16.gmra.mrb[0].mxu0 %v174
    %v358 = vpop.f32.mrb[0].mxu0
    %v359 = vadd.f32 %v162, %v358
    %v360 = vpop.f32.mrb[0].mxu0
    %v361 = vpop.f32.mrb[0].mxu0
    %v362 = vadd.f32 %v162, %v361
    %v363 = vpop.f32.mrb[0].mxu0
    %364 = vdwg.mxu0
    %365 = vmatprep.subr.bf16.mxu0 0
    %366 = vmatpush1.bf16.msra.mxu0 %v292
    %367 = vmatprep.subr.bf16.mxu0 0
    %368 = vmatpush1.bf16.msra.mxu0 %v293
    %369 = vmatprep.subr.bf16.mxu0 0
    %370 = vmatpush1.bf16.msra.mxu0 %v294
    %371 = vmatprep.subr.bf16.mxu0 0
    %372 = vmatpush1.bf16.msra.mxu0 %v295
    %373 = vmatprep.subr.bf16.mxu0 0
    %374 = vmatpush1.bf16.msra.mxu0 %v296
    %375 = vmatprep.subr.bf16.mxu0 0
    %376 = vmatpush1.bf16.msra.mxu0 %v297
    %377 = vmatprep.subr.bf16.mxu0 0
    %378 = vmatpush1.bf16.msra.mxu0 %v298
    %379 = vmatprep.subr.bf16.mxu0 0
    %380 = vmatpush1.bf16.msra.mxu0 %v299
    %381 = vmatprep.subr.bf16.mxu0 0
    %382 = vmatpush1.bf16.msra.mxu0 0
    %383 = vmatprep.subr.bf16.mxu0 0
    %384 = vmatpush1.bf16.msra.mxu0 0
    %385 = vmatprep.subr.bf16.mxu0 0
    %386 = vmatpush1.bf16.msra.mxu0 0
    %387 = vmatprep.subr.bf16.mxu0 0
    %388 = vmatpush1.bf16.msra.mxu0 0
    %389 = vmatprep.subr.bf16.mxu0 0
    %390 = vmatpush1.bf16.msra.mxu0 0
    %391 = vmatprep.subr.bf16.mxu0 0
    %392 = vmatpush1.bf16.msra.mxu0 0
    %393 = vmatprep.subr.bf16.mxu0 0
    %394 = vmatpush1.bf16.msra.mxu0 0
    %395 = vmatprep.subr.bf16.mxu0 0
    %396 = vmatpush1.bf16.msra.mxu0 0
    %397 = vmatprep.mubr.bf16.mxu0 0
    %398 = vmatmul.mubr.bf16.gmra.mrb[0].mxu0 %v176
    %v399 = vpop.f32.mrb[0].mxu0
    %v400 = vadd.f32 %v359, %v399
    %v401 = vpop.f32.mrb[0].mxu0
    %v402 = vpop.f32.mrb[0].mxu0
    %v403 = vadd.f32 %v362, %v402
    %v404 = vpop.f32.mrb[0].mxu0
    %405 = vdwg.mxu0
    %v406 = vtanh.pop %v400
    %v407 = vtanh.pop %v403
    %v408 = vpack.c.bf16 %v407, %v406
    %v409 = vld [vmem:[#allocation7] sm:$0xf]
    %v410 = vld [vmem:[#allocation7 + $0x4] sm:$0xf]
    %v411 = vld [vmem:[#allocation7 + $0x8] sm:$0xf]
    %v412 = vld [vmem:[#allocation7 + $0xc] sm:$0xf]
    %v413 = vld [vmem:[#allocation7 + $0x10] sm:$0xf]
    %v414 = vld [vmem:[#allocation7 + $0x14] sm:$0xf]
    %v415 = vld [vmem:[#allocation7 + $0x18] sm:$0xf]
    %v416 = vld [vmem:[#allocation7 + $0x1c] sm:$0xf]
    %v417 = vld [vmem:[#allocation7 + $0x20] sm:$0xf]
    %v418 = vld [vmem:[#allocation7 + $0x24] sm:$0xf]
    %v419 = vld [vmem:[#allocation7 + $0x28] sm:$0xf]
    %v420 = vld [vmem:[#allocation7 + $0x2c] sm:$0xf]
    %v421 = vld [vmem:[#allocation7 + $0x30] sm:$0xf]
    %v422 = vld [vmem:[#allocation7 + $0x34] sm:$0xf]
    %v423 = vld [vmem:[#allocation7 + $0x38] sm:$0xf]
    %v424 = vld [vmem:[#allocation7 + $0x3c] sm:$0xf]
    %v425 = vld [vmem:[%s4] sm:$0x1]
    %v427 = vlaneseq
    %v428 = vshrl.u32 %v427, 7
    %v429 = vsub.s32 0, %v428
    %v430 = vrot.slane %v425, %v429
    %v448 = vunpack.c.l.b16 %v409
    %v449 = vunpack.c.l.b16 %v410
    %v450 = vunpack.c.l.b16 %v411
    %v451 = vunpack.c.l.b16 %v412
    %v452 = vunpack.c.l.b16 %v413
    %v453 = vunpack.c.l.b16 %v414
    %v454 = vunpack.c.l.b16 %v415
    %v455 = vunpack.c.l.b16 %v416
    %v456 = vunpack.c.l.b16 %v417
    %v457 = vunpack.c.l.b16 %v418
    %v458 = vunpack.c.l.b16 %v419
    %v459 = vunpack.c.l.b16 %v420
    %v460 = vunpack.c.l.b16 %v421
    %v461 = vunpack.c.l.b16 %v422
    %v462 = vunpack.c.l.b16 %v423
    %v463 = vunpack.c.l.b16 %v424
    %v464 = vpack.c.b16 %v449, %v448
    %v465 = vpack.c.b16 %v451, %v450
    %v466 = vpack.c.b16 %v453, %v452
    %v467 = vpack.c.b16 %v455, %v454
    %v468 = vpack.c.b16 %v457, %v456
    %v469 = vpack.c.b16 %v459, %v458
    %v470 = vpack.c.b16 %v461, %v460
    %v471 = vpack.c.b16 %v463, %v462
    %480 = vmatprep.subr.bf16.mxu0 0
    %481 = vmatpush1.bf16.msra.mxu0 %v464
    %482 = vmatprep.subr.bf16.mxu0 0
    %483 = vmatpush1.bf16.msra.mxu0 %v465
    %484 = vmatprep.subr.bf16.mxu0 0
    %485 = vmatpush1.bf16.msra.mxu0 %v466
    %486 = vmatprep.subr.bf16.mxu0 0
    %487 = vmatpush1.bf16.msra.mxu0 %v467
    %488 = vmatprep.subr.bf16.mxu0 0
    %489 = vmatpush1.bf16.msra.mxu0 %v468
    %490 = vmatprep.subr.bf16.mxu0 0
    %491 = vmatpush1.bf16.msra.mxu0 %v469
    %492 = vmatprep.subr.bf16.mxu0 0
    %493 = vmatpush1.bf16.msra.mxu0 %v470
    %494 = vmatprep.subr.bf16.mxu0 0
    %495 = vmatpush1.bf16.msra.mxu0 %v471
    %496 = vmatprep.subr.bf16.mxu0 0
    %497 = vmatpush1.bf16.msra.mxu0 0
    %498 = vmatprep.subr.bf16.mxu0 0
    %499 = vmatpush1.bf16.msra.mxu0 0
    %500 = vmatprep.subr.bf16.mxu0 0
    %501 = vmatpush1.bf16.msra.mxu0 0
    %502 = vmatprep.subr.bf16.mxu0 0
    %503 = vmatpush1.bf16.msra.mxu0 0
    %504 = vmatprep.subr.bf16.mxu0 0
    %505 = vmatpush1.bf16.msra.mxu0 0
    %506 = vmatprep.subr.bf16.mxu0 0
    %507 = vmatpush1.bf16.msra.mxu0 0
    %508 = vmatprep.subr.bf16.mxu0 0
    %509 = vmatpush1.bf16.msra.mxu0 0
    %510 = vmatprep.subr.bf16.mxu0 0
    %511 = vmatpush1.bf16.msra.mxu0 0
    %512 = vmatprep.mubr.bf16.mxu0 0
    %513 = vmatmul.mubr.bf16.gmra.mrb[0].mxu0 %v408
    %v514 = vpop.f32.mrb[0].mxu0
    %v515 = vadd.f32 %v430, %v514
    %v516 = vpop.f32.mrb[0].mxu0
    %v517 = vpop.f32.mrb[0].mxu0
    %v518 = vadd.f32 %v430, %v517
    %v519 = vpop.f32.mrb[0].mxu0
    %520 = vdwg.mxu0
    %v521 = vpack.c.bf16 %v518, %v515
    %v522 = vld [vmem:[#allocation8] sm:$0xf]
    %v523 = vld [vmem:[#allocation8 + $0x4] sm:$0xf]
    %v524 = vld [vmem:[#allocation8 + $0x8] sm:$0xf]
    %v525 = vld [vmem:[#allocation8 + $0xc] sm:$0xf]
    %v526 = vld [vmem:[#allocation8 + $0x10] sm:$0xf]
    %v527 = vld [vmem:[#allocation8 + $0x14] sm:$0xf]
    %v528 = vld [vmem:[#allocation8 + $0x18] sm:$0xf]
    %v529 = vld [vmem:[#allocation8 + $0x1c] sm:$0xf]
    %v530 = vld [vmem:[#allocation8 + $0x20] sm:$0xf]
    %v531 = vld [vmem:[#allocation8 + $0x24] sm:$0xf]
    %v532 = vld [vmem:[#allocation8 + $0x28] sm:$0xf]
    %v533 = vld [vmem:[#allocation8 + $0x2c] sm:$0xf]
    %v534 = vld [vmem:[#allocation8 + $0x30] sm:$0xf]
    %v535 = vld [vmem:[#allocation8 + $0x34] sm:$0xf]
    %v536 = vld [vmem:[#allocation8 + $0x38] sm:$0xf]
    %v537 = vld [vmem:[#allocation8 + $0x3c] sm:$0xf]
    %v538 = vld [vmem:[%s6] sm:$0x1]
    %v540 = vlaneseq
    %v541 = vshrl.u32 %v540, 7
    %v542 = vsub.s32 0, %v541
    %v543 = vrot.slane %v538, %v542
    %v561 = vunpack.c.l.b16 %v522
    %v562 = vunpack.c.l.b16 %v523
    %v563 = vunpack.c.l.b16 %v524
    %v564 = vunpack.c.l.b16 %v525
    %v565 = vunpack.c.l.b16 %v526
    %v566 = vunpack.c.l.b16 %v527
    %v567 = vunpack.c.l.b16 %v528
    %v568 = vunpack.c.l.b16 %v529
    %v569 = vunpack.c.l.b16 %v530
    %v570 = vunpack.c.l.b16 %v531
    %v571 = vunpack.c.l.b16 %v532
    %v572 = vunpack.c.l.b16 %v533
    %v573 = vunpack.c.l.b16 %v534
    %v574 = vunpack.c.l.b16 %v535
    %v575 = vunpack.c.l.b16 %v536
    %v576 = vunpack.c.l.b16 %v537
    %v577 = vpack.c.b16 %v562, %v561
    %v578 = vpack.c.b16 %v564, %v563
    %v579 = vpack.c.b16 %v566, %v565
    %v580 = vpack.c.b16 %v568, %v567
    %v581 = vpack.c.b16 %v570, %v569
    %v582 = vpack.c.b16 %v572, %v571
    %v583 = vpack.c.b16 %v574, %v573
    %v584 = vpack.c.b16 %v576, %v575
    %593 = vmatprep.subr.bf16.mxu0 0
    %594 = vmatpush1.bf16.msra.mxu0 %v577
    %595 = vmatprep.subr.bf16.mxu0 0
    %596 = vmatpush1.bf16.msra.mxu0 %v578
    %597 = vmatprep.subr.bf16.mxu0 0
    %598 = vmatpush1.bf16.msra.mxu0 %v579
    %599 = vmatprep.subr.bf16.mxu0 0
    %600 = vmatpush1.bf16.msra.mxu0 %v580
    %601 = vmatprep.subr.bf16.mxu0 0
    %602 = vmatpush1.bf16.msra.mxu0 %v581
    %603 = vmatprep.subr.bf16.mxu0 0
    %604 = vmatpush1.bf16.msra.mxu0 %v582
    %605 = vmatprep.subr.bf16.mxu0 0
    %606 = vmatpush1.bf16.msra.mxu0 %v583
    %607 = vmatprep.subr.bf16.mxu0 0
    %608 = vmatpush1.bf16.msra.mxu0 %v584
    %609 = vmatprep.subr.bf16.mxu0 0
    %610 = vmatpush1.bf16.msra.mxu0 0
    %611 = vmatprep.subr.bf16.mxu0 0
    %612 = vmatpush1.bf16.msra.mxu0 0
    %613 = vmatprep.subr.bf16.mxu0 0
    %614 = vmatpush1.bf16.msra.mxu0 0
    %615 = vmatprep.subr.bf16.mxu0 0
    %616 = vmatpush1.bf16.msra.mxu0 0
    %617 = vmatprep.subr.bf16.mxu0 0
    %618 = vmatpush1.bf16.msra.mxu0 0
    %619 = vmatprep.subr.bf16.mxu0 0
    %620 = vmatpush1.bf16.msra.mxu0 0
    %621 = vmatprep.subr.bf16.mxu0 0
    %622 = vmatpush1.bf16.msra.mxu0 0
    %623 = vmatprep.subr.bf16.mxu0 0
    %624 = vmatpush1.bf16.msra.mxu0 0
    %625 = vmatprep.mubr.bf16.mxu0 0
    %626 = vmatmul.mubr.bf16.gmra.mrb[0].mxu0 %v521
    %v627 = vpop.f32.mrb[0].mxu0
    %v628 = vadd.f32 %v543, %v627
    %v629 = vpop.f32.mrb[0].mxu0
    %v630 = vpop.f32.mrb[0].mxu0
    %v631 = vadd.f32 %v543, %v630
    %v632 = vpop.f32.mrb[0].mxu0
    %633 = vdwg.mxu0
    %v634 = vtanh.pop %v628
    %v635 = vtanh.pop %v631
    %v636 = vpack.c.bf16 %v635, %v634
    %v637 = vld [vmem:[#allocation10] sm:$0xff]
    %v638 = vld [vmem:[#allocation10 + $0x8] sm:$0xf]
    %v639 = vld [vmem:[#allocation10 + $0xc] sm:$0xff]
    %v640 = vld [vmem:[#allocation10 + $0x14] sm:$0xf]
    %v641 = vld [vmem:[#allocation10 + $0x18] sm:$0xff]
    %v642 = vld [vmem:[#allocation10 + $0x20] sm:$0xf]
    %v643 = vld [vmem:[#allocation10 + $0x24] sm:$0xff]
    %v644 = vld [vmem:[#allocation10 + $0x2c] sm:$0xf]
    %v645 = vld [vmem:[#allocation10 + $0x30] sm:$0xff]
    %v646 = vld [vmem:[#allocation10 + $0x38] sm:$0xf]
    %v647 = vld [vmem:[#allocation10 + $0x3c] sm:$0xff]
    %v648 = vld [vmem:[#allocation10 + $0x44] sm:$0xf]
    %v649 = vld [vmem:[#allocation10 + $0x48] sm:$0xff]
    %v650 = vld [vmem:[#allocation10 + $0x50] sm:$0xf]
    %v651 = vld [vmem:[#allocation10 + $0x54] sm:$0xff]
    %v652 = vld [vmem:[#allocation10 + $0x5c] sm:$0xf]
    %v653 = vld [vmem:[#allocation10 + $0x60] sm:$0xff]
    %v654 = vld [vmem:[#allocation10 + $0x68] sm:$0xf]
    %v655 = vld [vmem:[#allocation10 + $0x6c] sm:$0xff]
    %v656 = vld [vmem:[#allocation10 + $0x74] sm:$0xf]
    %v657 = vld [vmem:[#allocation10 + $0x78] sm:$0xff]
    %v658 = vld [vmem:[#allocation10 + $0x80] sm:$0xf]
    %v659 = vld [vmem:[#allocation10 + $0x84] sm:$0xff]
    %v660 = vld [vmem:[#allocation10 + $0x8c] sm:$0xf]
    %v661 = vld [vmem:[#allocation10 + $0x90] sm:$0xff]
    %v662 = vld [vmem:[#allocation10 + $0x98] sm:$0xf]
    %v663 = vld [vmem:[#allocation10 + $0x9c] sm:$0xff]
    %v664 = vld [vmem:[#allocation10 + $0xa4] sm:$0xf]
    %v665 = vld [vmem:[#allocation10 + $0xa8] sm:$0xff]
    %v666 = vld [vmem:[#allocation10 + $0xb0] sm:$0xf]
    %v667 = vld [vmem:[#allocation10 + $0xb4] sm:$0xff]
    %v668 = vld [vmem:[#allocation10 + $0xbc] sm:$0xf]
    %v669 = vld [vmem:[%s8] sm:$0x7]
    %v671 = vlaneseq
    %v672 = vshrl.u32 %v671, 7
    %v673 = vsub.s32 0, %v672
    %v674 = vrot.slane %v669, %v673
    %v675 = vlaneseq
    %v676 = vshrl.u32 %v675, 7
    %v677 = vsub.s32 1, %v676
    %v678 = vrot.slane %v669, %v677
    %v679 = vlaneseq
    %v680 = vshrl.u32 %v679, 7
    %v681 = vsub.s32 2, %v680
    %v682 = vrot.slane %v669, %v681
    %v718 = vunpack.c.l.b16 %v637
    %v719 = vunpack.c.h.b16 %v637
    %v720 = vunpack.c.l.b16 %v638
    %v721 = vunpack.c.l.b16 %v639
    %v722 = vunpack.c.h.b16 %v639
    %v723 = vunpack.c.l.b16 %v640
    %v724 = vunpack.c.l.b16 %v641
    %v725 = vunpack.c.h.b16 %v641
    %v726 = vunpack.c.l.b16 %v642
    %v727 = vunpack.c.l.b16 %v643
    %v728 = vunpack.c.h.b16 %v643
    %v729 = vunpack.c.l.b16 %v644
    %v730 = vunpack.c.l.b16 %v645
    %v731 = vunpack.c.h.b16 %v645
    %v732 = vunpack.c.l.b16 %v646
    %v733 = vunpack.c.l.b16 %v647
    %v734 = vunpack.c.h.b16 %v647
    %v735 = vunpack.c.l.b16 %v648
    %v736 = vunpack.c.l.b16 %v649
    %v737 = vunpack.c.h.b16 %v649
    %v738 = vunpack.c.l.b16 %v650
    %v739 = vunpack.c.l.b16 %v651
    %v740 = vunpack.c.h.b16 %v651
    %v741 = vunpack.c.l.b16 %v652
    %v742 = vunpack.c.l.b16 %v653
    %v743 = vunpack.c.h.b16 %v653
    %v744 = vunpack.c.l.b16 %v654
    %v745 = vunpack.c.l.b16 %v655
    %v746 = vunpack.c.h.b16 %v655
    %v747 = vunpack.c.l.b16 %v656
    %v748 = vunpack.c.l.b16 %v657
    %v749 = vunpack.c.h.b16 %v657
    %v750 = vunpack.c.l.b16 %v658
    %v751 = vunpack.c.l.b16 %v659
    %v752 = vunpack.c.h.b16 %v659
    %v753 = vunpack.c.l.b16 %v660
    %v754 = vunpack.c.l.b16 %v661
    %v755 = vunpack.c.h.b16 %v661
    %v756 = vunpack.c.l.b16 %v662
    %v757 = vunpack.c.l.b16 %v663
    %v758 = vunpack.c.h.b16 %v663
    %v759 = vunpack.c.l.b16 %v664
    %v760 = vunpack.c.l.b16 %v665
    %v761 = vunpack.c.h.b16 %v665
    %v762 = vunpack.c.l.b16 %v666
    %v763 = vunpack.c.l.b16 %v667
    %v764 = vunpack.c.h.b16 %v667
    %v765 = vunpack.c.l.b16 %v668
    %v766 = vpack.c.b16 %v721, %v718
    %v767 = vpack.c.b16 %v722, %v719
    %v768 = vpack.c.b16 %v723, %v720
    %v769 = vpack.c.b16 %v727, %v724
    %v770 = vpack.c.b16 %v728, %v725
    %v771 = vpack.c.b16 %v729, %v726
    %v772 = vpack.c.b16 %v733, %v730
    %v773 = vpack.c.b16 %v734, %v731
    %v774 = vpack.c.b16 %v735, %v732
    %v775 = vpack.c.b16 %v739, %v736
    %v776 = vpack.c.b16 %v740, %v737
    %v777 = vpack.c.b16 %v741, %v738
    %v778 = vpack.c.b16 %v745, %v742
    %v779 = vpack.c.b16 %v746, %v743
    %v780 = vpack.c.b16 %v747, %v744
    %v781 = vpack.c.b16 %v751, %v748
    %v782 = vpack.c.b16 %v752, %v749
    %v783 = vpack.c.b16 %v753, %v750
    %v784 = vpack.c.b16 %v757, %v754
    %v785 = vpack.c.b16 %v758, %v755
    %v786 = vpack.c.b16 %v759, %v756
    %v787 = vpack.c.b16 %v763, %v760
    %v788 = vpack.c.b16 %v764, %v761
    %v789 = vpack.c.b16 %v765, %v762
    %814 = vmatprep.subr.bf16.mxu0 %v767
    %815 = vmatpush1.bf16.msra.mxu0 %v766
    %816 = vmatprep.subr.bf16.mxu0 %v770
    %817 = vmatpush1.bf16.msra.mxu0 %v769
    %818 = vmatprep.subr.bf16.mxu0 %v773
    %819 = vmatpush1.bf16.msra.mxu0 %v772
    %820 = vmatprep.subr.bf16.mxu0 %v776
    %821 = vmatpush1.bf16.msra.mxu0 %v775
    %822 = vmatprep.subr.bf16.mxu0 %v779
    %823 = vmatpush1.bf16.msra.mxu0 %v778
    %824 = vmatprep.subr.bf16.mxu0 %v782
    %825 = vmatpush1.bf16.msra.mxu0 %v781
    %826 = vmatprep.subr.bf16.mxu0 %v785
    %827 = vmatpush1.bf16.msra.mxu0 %v784
    %828 = vmatprep.subr.bf16.mxu0 %v788
    %829 = vmatpush1.bf16.msra.mxu0 %v787
    %830 = vmatprep.subr.bf16.mxu0 0
    %831 = vmatpush1.bf16.msra.mxu0 0
    %832 = vmatprep.subr.bf16.mxu0 0
    %833 = vmatpush1.bf16.msra.mxu0 0
    %834 = vmatprep.subr.bf16.mxu0 0
    %835 = vmatpush1.bf16.msra.mxu0 0
    %836 = vmatprep.subr.bf16.mxu0 0
    %837 = vmatpush1.bf16.msra.mxu0 0
    %838 = vmatprep.subr.bf16.mxu0 0
    %839 = vmatpush1.bf16.msra.mxu0 0
    %840 = vmatprep.subr.bf16.mxu0 0
    %841 = vmatpush1.bf16.msra.mxu0 0
    %842 = vmatprep.subr.bf16.mxu0 0
    %843 = vmatpush1.bf16.msra.mxu0 0
    %844 = vmatprep.subr.bf16.mxu0 0
    %845 = vmatpush1.bf16.msra.mxu0 0
    %846 = vmatprep.mubr.bf16.mxu0 0
    %847 = vmatmul.mubr.bf16.gmra.mrb[0].mxu0 %v636
    %v848 = vpop.f32.mrb[0].mxu0
    %v849 = vadd.f32 %v674, %v848
    %v850 = vpop.f32.mrb[0].mxu0
    %v851 = vadd.f32 %v678, %v850
    %v852 = vpop.f32.mrb[0].mxu0
    %v853 = vadd.f32 %v674, %v852
    %v854 = vpop.f32.mrb[0].mxu0
    %v855 = vadd.f32 %v678, %v854
    %856 = vdwg.mxu0
    %857 = vmatprep.subr.bf16.mxu0 0
    %858 = vmatpush1.bf16.msra.mxu0 %v768
    %859 = vmatprep.subr.bf16.mxu0 0
    %860 = vmatpush1.bf16.msra.mxu0 %v771
    %861 = vmatprep.subr.bf16.mxu0 0
    %862 = vmatpush1.bf16.msra.mxu0 %v774
    %863 = vmatprep.subr.bf16.mxu0 0
    %864 = vmatpush1.bf16.msra.mxu0 %v777
    %865 = vmatprep.subr.bf16.mxu0 0
    %866 = vmatpush1.bf16.msra.mxu0 %v780
    %867 = vmatprep.subr.bf16.mxu0 0
    %868 = vmatpush1.bf16.msra.mxu0 %v783
    %869 = vmatprep.subr.bf16.mxu0 0
    %870 = vmatpush1.bf16.msra.mxu0 %v786
    %871 = vmatprep.subr.bf16.mxu0 0
    %872 = vmatpush1.bf16.msra.mxu0 %v789
    %873 = vmatprep.subr.bf16.mxu0 0
    %874 = vmatpush1.bf16.msra.mxu0 0
    %875 = vmatprep.subr.bf16.mxu0 0
    %876 = vmatpush1.bf16.msra.mxu0 0
    %877 = vmatprep.subr.bf16.mxu0 0
    %878 = vmatpush1.bf16.msra.mxu0 0
    %879 = vmatprep.subr.bf16.mxu0 0
    %880 = vmatpush1.bf16.msra.mxu0 0
    %881 = vmatprep.subr.bf16.mxu0 0
    %882 = vmatpush1.bf16.msra.mxu0 0
    %883 = vmatprep.subr.bf16.mxu0 0
    %884 = vmatpush1.bf16.msra.mxu0 0
    %885 = vmatprep.subr.bf16.mxu0 0
    %886 = vmatpush1.bf16.msra.mxu0 0
    %887 = vmatprep.subr.bf16.mxu0 0
    %888 = vmatpush1.bf16.msra.mxu0 0
    %889 = vmatprep.mubr.bf16.mxu0 0
    %890 = vmatmul.mubr.bf16.gmra.mrb[0].mxu0 %v636
    %v891 = vpop.f32.mrb[0].mxu0
    %v892 = vadd.f32 %v682, %v891
    %v893 = vpop.f32.mrb[0].mxu0
    %v894 = vpop.f32.mrb[0].mxu0
    %v895 = vadd.f32 %v682, %v894
    %v896 = vpop.f32.mrb[0].mxu0
    %897 = vdwg.mxu0
    %898 = vst [vmem:[#allocation11] sm:$0xff] %v515
    %899 = vst [vmem:[#allocation11 + $0x8] sm:$0xff] %v518
    %900 = vst [vmem:[#allocation12] sm:$0xff] %v849
    %901 = vst [vmem:[#allocation12 + $0x8] sm:$0xff] %v851
    %902 = vst [vmem:[#allocation12 + $0x10] sm:$0xff] %v892
    %903 = vst [vmem:[#allocation12 + $0x18] sm:$0xff] %v853
    %904 = vst [vmem:[#allocation12 + $0x20] sm:$0xff] %v855
    %905 = vst [vmem:[#allocation12 + $0x28] sm:$0xff] %v895
    // Predicated region
    $region58: #{tpu_custom_call.1} parent=1 // pred_check
      _
    $region59: #{tpu_custom_call.1} parent=1 // pred_check_branch
      %907 = sbr.rel (0) target = $region61
    $region60: #{tpu_custom_call.1} parent=1 // pred_region
      %s909 = ssub.s32 256, 256
      %910 = vsyncadd [#allocation4], %s909
      %s911 = sshll.u32 [#allocation11], 4
      %s912 = int_to_ptr.vmem [resolvable:$true] %s911
      %917 = dma.vmem_to_hbm [thread:$0]  %s912, 256, %s9, [#allocation4], 128, 128, 8
    $region61: #{tpu_custom_call.1} parent=1 // pred_fallthru
      _
    // Predicated region
    $region62: #{tpu_custom_call.1} parent=1 // pred_check
      _
    $region63: #{tpu_custom_call.1} parent=1 // pred_check_branch
      %919 = sbr.rel (0) target = $region65
    $region64: #{tpu_custom_call.1} parent=1 // pred_region
      %s921 = ssub.s32 768, 768
      %922 = vsyncadd [#allocation13], %s921
      %s923 = sshll.u32 [#allocation12], 4
      %s924 = int_to_ptr.vmem [resolvable:$true] %s923
      %929 = dma.vmem_to_hbm [thread:$0]  %s924, 768, %s10, [#allocation13], 384, 384, 24
    $region65: #{tpu_custom_call.1} parent=1 // pred_fallthru
      _
    // Predicated region
    $region66: #{tpu_custom_call.1} parent=1 // pred_check
      _
    $region67: #{tpu_custom_call.1} parent=1 // pred_check_branch
      %931 = sbr.rel (0) target = $region69
    $region68: #{tpu_custom_call.1} parent=1 // pred_region
      %932 = dma.done [#allocation4], 256
    $region69: #{tpu_custom_call.1} parent=1 // pred_fallthru
      _
    // Predicated region
    $region70: #{tpu_custom_call.1} parent=1 // pred_check
      _
    $region71: #{tpu_custom_call.1} parent=1 // pred_check_branch
      %934 = sbr.rel (0) target = $region73
    $region72: #{tpu_custom_call.1} parent=1 // pred_region
      %935 = dma.done [#allocation13], 768
    $region73: #{tpu_custom_call.1} parent=1 // pred_fallthru
      _
    %936 = vsyncpa [#allocation3], 1
    %937 = vsyncpa [#allocation6], 1
    %938 = vsyncpa [#allocation9], 1
    %939 = vsyncpa [#allocation4], 1
    %940 = vsyncpa [#allocation13], 1

</llo_original>
